<compile_context>
chip_gen: v7x
topology: tpu7x:2x2x1
jax: 0.10.0
libtpu: 0.0.40
codegen_flags: <defaults>
</compile_context>

<pallas_src>
import functools

import jax
import jax.numpy as jnp
from jax.experimental import pallas as pl
from jax.experimental.pallas import tpu as pltpu


# ------------------------------ fused kernel --------------------------------

def _cnn_fused_kernel(xs_ref, w1p_ref, b1p_ref, w2m_ref, b2_ref,
                      fc1w_ref, fc1b_ref, fc2w_ref, fc2b_ref, out_ref,
                      *, L4, TB, compute_dtype):
    """Whole forward pass for one batch tile (lane index = r*TB + b).

    xs_ref  : (1, 4, L4*TB)  xs[0, q, r*TB+b] = x[b, 4r+q]      (compute_dtype)
    w1p_ref : (64, 6)        conv1 taps, row = phase*16+cout    (compute_dtype)
    b1p_ref : (64, 1)        conv1 bias tiled over 4 phases     (f32)
    w2m_ref : (32, 48)       conv2 weight, col = tap*16 + cin   (compute_dtype)
    b2_ref  : (32, 1)                                           (f32)
    fc1w_ref: (64, 32*L4)    fc1 weight, col = r*32 + c         (compute_dtype)
    fc1b_ref: (64, 1)                                           (f32)
    fc2w_ref: (C, 64)                                           (compute_dtype)
    fc2b_ref: (C, 1)                                            (f32)
    out_ref : (1, C, TB)                                        (f32)
    """
    cd = compute_dtype
    N = L4 * TB

    xp = xs_ref[0]                                   # (4, N)
    x0 = xp[0:1, :]                                  # x[4r]
    x3 = xp[3:4, :]                                  # x[4r+3]
    zrow = jnp.zeros((1, TB), cd)
    if L4 > 1:
        # shifts along r are whole lane-block shifts (zeros at the seq border)
        x3m1 = jnp.concatenate([zrow, x3[:, :N - TB]], axis=1)   # x[4r-1]
        x0p1 = jnp.concatenate([x0[:, TB:], zrow], axis=1)       # x[4r+4]
    else:
        x3m1 = zrow
        x0p1 = zrow
    xphase = jnp.concatenate([x3m1, xp, x0p1], axis=0)           # (6, N)

    # ---- conv1 (1->16, k=3, pad=1) + ReLU, all 4 output phases: one matmul --
    a1 = jnp.dot(w1p_ref[...], xphase, preferred_element_type=jnp.float32)
    a1 = jnp.maximum(a1 + b1p_ref[...], 0.0)                     # (64, N) f32

    # ---- maxpool #1 (k=2, s=2): p1[2r] / p1[2r+1] ---------------------------
    p1e = jnp.maximum(a1[0:16, :], a1[16:32, :]).astype(cd)      # (16, N)
    p1o = jnp.maximum(a1[32:48, :], a1[48:64, :]).astype(cd)

    zslab = jnp.zeros((16, TB), cd)
    if L4 > 1:
        p1o_m1 = jnp.concatenate([zslab, p1o[:, :N - TB]], axis=1)  # p1[2r-1]
        p1e_p1 = jnp.concatenate([p1e[:, TB:], zslab], axis=1)      # p1[2r+2]
    else:
        p1o_m1 = zslab
        p1e_p1 = zslab

    # ---- conv2 (16->32, k=3, pad=1) + ReLU + maxpool #2: two matmuls --------
    # Patch rows ordered tap*16+cin; even / odd conv2 outputs are sublane
    # windows [0:48] / [16:64] of a single 64-row stack (built once).
    stack = jnp.concatenate([p1o_m1, p1e, p1o, p1e_p1], axis=0)  # (64, N)
    w2m = w2m_ref[...]
    z_e = jnp.dot(w2m, stack[0:48, :], preferred_element_type=jnp.float32)
    z_o = jnp.dot(w2m, stack[16:64, :], preferred_element_type=jnp.float32)
    a2 = jnp.maximum(jnp.maximum(z_e, z_o) + b2_ref[...], 0.0)   # (32, N) f32
    a2 = a2.astype(cd)

    # ---- relayout (32, L4*TB) -> (32*L4, TB), row = r*32 + c ----------------
    # Aligned lane-block slices stacked on sublanes (the torch flatten order is
    # pre-folded into fc1w in the wrapper).
    if L4 > 1:
        a2k = jnp.concatenate(
            [a2[:, r * TB:(r + 1) * TB] for r in range(L4)], axis=0)
    else:
        a2k = a2                                                  # (32*L4, TB)

    # ---- fc1 + ReLU (contracts channels AND positions in one matmul), fc2 ---
    h = jnp.dot(fc1w_ref[...], a2k, preferred_element_type=jnp.float32)
    h = jnp.maximum(h + fc1b_ref[...], 0.0).astype(cd)            # (64, TB)
    out = jnp.dot(fc2w_ref[...], h, preferred_element_type=jnp.float32)
    out_ref[0] = (out + fc2b_ref[...]).astype(out_ref.dtype)      # (C, TB)


# ------------------------------ wrapper --------------------------------------

def cnn_forward(x, params, *, compute_dtype=jnp.float32, batch_tile=256):
    """x: (B, input_size) f32 -- matches CNN.forward before unsqueeze(1)."""
    B, L = x.shape
    if L % 4 != 0 or L < 4:
        raise ValueError("input_size must be a positive multiple of 4")
    L4 = L // 4
    C = params["fc2_b"].shape[0]

    # Batch tile = lane width of every in-kernel tensor.  Whole batch if small;
    # otherwise a multiple of 128 lanes, chosen so there are >=2 grid steps
    # (lets the "parallel" axis shard across v7x's two TensorCores).
    if B <= 128:
        TB = B
    else:
        TB = max(128, min((max(batch_tile, 128) // 128) * 128,
                          128 * ((pl.cdiv(B, 128) + 1) // 2)))
    n_tiles = pl.cdiv(B, TB)
    B_pad = n_tiles * TB
    x_pad = jnp.pad(x, ((0, B_pad - B), (0, 0))) if B_pad != B else x

    # Re-phase the input: xs[i, q, r*TB + b] = x[i*TB + b, 4r + q].
    xs = (x_pad.reshape(n_tiles, TB, L4, 4)
          .transpose(0, 3, 2, 1)
          .reshape(n_tiles, 4, L4 * TB)
          .astype(compute_dtype))

    # Weight-only layout prep (tiny, plain XLA; no activation traffic).
    w1_taps = params["w1"][:, 0, :].astype(jnp.float32)            # (16, 3)
    w1p = jnp.zeros((4, 16, 6), jnp.float32)
    for p in range(4):                                             # phase band
        w1p = w1p.at[p, :, p:p + 3].set(w1_taps)
    w1p = w1p.reshape(64, 6).astype(compute_dtype)
    b1p = jnp.tile(params["b1"].astype(jnp.float32), 4).reshape(64, 1)
    w2m = params["w2"].transpose(0, 2, 1).reshape(32, 48).astype(compute_dtype)
    b2 = params["b2"].reshape(32, 1).astype(jnp.float32)
    fc1w = (params["fc1_w"].reshape(64, 32, L4).transpose(0, 2, 1)
            .reshape(64, 32 * L4).astype(compute_dtype))           # col=r*32+c
    fc1b = params["fc1_b"].reshape(64, 1).astype(jnp.float32)
    fc2w = params["fc2_w"].astype(compute_dtype)                   # (C, 64)
    fc2b = params["fc2_b"].reshape(C, 1).astype(jnp.float32)

    # VMEM budget: double-buffered xs + resident weights + live activations.
    isz = jnp.dtype(compute_dtype).itemsize
    N = L4 * TB
    weight_bytes = (64 * 6 + 32 * 48 + 64 * 32 * L4 + C * 64) * isz + 200 * 4
    est = 2 * weight_bytes + 2 * 8 * N * isz + 340 * N * 4 + 80 * TB * 4
    vmem_limit = int(min(100 << 20, max(32 << 20, est + (4 << 20))))

    kernel = functools.partial(_cnn_fused_kernel, L4=L4, TB=TB,
                               compute_dtype=compute_dtype)
    out = pl.pallas_call(
        kernel,
        out_shape=jax.ShapeDtypeStruct((n_tiles, C, TB), jnp.float32),
        grid=(n_tiles,),
        in_specs=[
            pl.BlockSpec((1, 4, L4 * TB), lambda i: (i, 0, 0)),    # x phases
            pl.BlockSpec((64, 6), lambda i: (0, 0)),               # conv1 w
            pl.BlockSpec((64, 1), lambda i: (0, 0)),               # conv1 b
            pl.BlockSpec((32, 48), lambda i: (0, 0)),              # conv2 w
            pl.BlockSpec((32, 1), lambda i: (0, 0)),               # conv2 b
            pl.BlockSpec((64, 32 * L4), lambda i: (0, 0)),         # fc1 w
            pl.BlockSpec((64, 1), lambda i: (0, 0)),               # fc1 b
            pl.BlockSpec((C, 64), lambda i: (0, 0)),               # fc2 w
            pl.BlockSpec((C, 1), lambda i: (0, 0)),                # fc2 b
        ],
        out_specs=pl.BlockSpec((1, C, TB), lambda i: (i, 0, 0)),
        compiler_params=pltpu.CompilerParams(
            dimension_semantics=("parallel",),
            vmem_limit_bytes=vmem_limit),
    )(xs, w1p, b1p, w2m, b2, fc1w, fc1b, fc2w, fc2b)

    # (n_tiles, C, TB) -> (B, C); padded batch rows are dropped.
    return out.transpose(0, 2, 1).reshape(B_pad, C)[:B]


# ------------------------------ params / reference ---------------------------

def init_params(key, input_size, num_classes):
    ks = jax.random.split(key, 8)
    f = lambda k, shape, s: (s * jax.random.normal(k, shape)).astype(jnp.float32)
    return {
        "w1": f(ks[0], (16, 1, 3), 0.3),        # Conv1d(1, 16, 3, pad=1)
        "b1": f(ks[1], (16,), 0.1),
        "w2": f(ks[2], (32, 16, 3), 0.1),       # Conv1d(16, 32, 3, pad=1)
        "b2": f(ks[3], (32,), 0.1),
        "fc1_w": f(ks[4], (64, 32 * (input_size // 4)), 0.05),
        "fc1_b": f(ks[5], (64,), 0.1),
        "fc2_w": f(ks[6], (num_classes, 64), 0.1),
        "fc2_b": f(ks[7], (num_classes,), 0.1),
    }


def reference_forward(x, params):
    B, L = x.shape
    xc = x[:, None, :]                                            # NCW
    dn = ("NCH", "OIH", "NCH")
    y1 = jax.lax.conv_general_dilated(xc, params["w1"], (1,), [(1, 1)],
                                      dimension_numbers=dn)
    y1 = jax.nn.relu(y1 + params["b1"][None, :, None])
    y1 = jnp.max(y1.reshape(B, 16, L // 2, 2), axis=-1)
    y2 = jax.lax.conv_general_dilated(y1, params["w2"], (1,), [(1, 1)],
                                      dimension_numbers=dn)
    y2 = jax.nn.relu(y2 + params["b2"][None, :, None])
    y2 = jnp.max(y2.reshape(B, 32, L // 4, 2), axis=-1)
    flat = y2.reshape(B, -1)
    h = jax.nn.relu(flat @ params["fc1_w"].T + params["fc1_b"])
    return h @ params["fc2_w"].T + params["fc2_b"]


if __name__ == "__main__":
    # Small config implied by the module: batch=2, input_size=16, num_classes=4.
    batch, input_size, num_classes = 2, 16, 4
    key = jax.random.PRNGKey(0)
    kx, kp = jax.random.split(key)
    x = jax.random.normal(kx, (batch, input_size), dtype=jnp.float32)
    params = init_params(kp, input_size, num_classes)

    fwd = jax.jit(cnn_forward, static_argnames=("compute_dtype", "batch_tile"))
    ref = reference_forward(x, params)

    # f32 path
    out_f32 = jax.block_until_ready(fwd(x, params, compute_dtype=jnp.float32))
    assert out_f32.shape == (batch, num_classes)
    assert jnp.allclose(out_f32, ref, atol=5e-3, rtol=5e-3), (
        float(jnp.max(jnp.abs(out_f32 - ref))))

    # bandwidth-optimized path: bf16 MXU operands, f32 accumulation/epilogue
    out_bf16 = jax.block_until_ready(fwd(x, params, compute_dtype=jnp.bfloat16))
    assert out_bf16.shape == (batch, num_classes)
    assert jnp.allclose(out_bf16, ref, atol=7e-2, rtol=7e-2), (
        float(jnp.max(jnp.abs(out_bf16 - ref))))

    # Exercise the tiled path (2 grid steps, padded batch, L4 > 1 relayout).
    batch2, input_size2 = 136, 32
    kx2, kp2 = jax.random.split(jax.random.PRNGKey(1))
    x2 = jax.random.normal(kx2, (batch2, input_size2), dtype=jnp.float32)
    params2 = init_params(kp2, input_size2, num_classes)
    out2 = jax.block_until_ready(fwd(x2, params2, compute_dtype=jnp.float32))
    ref2 = reference_forward(x2, params2)
    assert out2.shape == (batch2, num_classes)
    assert jnp.allclose(out2, ref2, atol=5e-3, rtol=5e-3), (
        float(jnp.max(jnp.abs(out2 - ref2))))

    print("KERNEL_OK")
</pallas_src>

<mosaic_0001>
module attributes {stable_mosaic.version = 11 : i64} {
  func.func @_cnn_fused_kernel(%arg0: i32, %arg1: memref<1x4x8xf32, #tpu.memory_space<vmem>>, %arg2: memref<64x6xf32, #tpu.memory_space<vmem>>, %arg3: memref<64x1xf32, #tpu.memory_space<vmem>>, %arg4: memref<32x48xf32, #tpu.memory_space<vmem>>, %arg5: memref<32x1xf32, #tpu.memory_space<vmem>>, %arg6: memref<64x128xf32, #tpu.memory_space<vmem>>, %arg7: memref<64x1xf32, #tpu.memory_space<vmem>>, %arg8: memref<4x64xf32, #tpu.memory_space<vmem>>, %arg9: memref<4x1xf32, #tpu.memory_space<vmem>>, %arg10: memref<1x4x2xf32, #tpu.memory_space<vmem>>) attributes {dimension_semantics = [#tpu.dimension_semantics<parallel>], iteration_bounds = array<i64: 1>, scalar_prefetch = 0 : i64, scratch_operands = 0 : i64, tpu.core_type = #tpu.core_type<tc>, window_params = [{transform_indices = @transform_0, window_bounds = array<i64: 1, 4, 8>}, {pipeline_mode = #tpu.pipeline_mode<synchronous>, transform_indices = @transform_1, window_bounds = array<i64: 64, 6>}, {pipeline_mode = #tpu.pipeline_mode<synchronous>, transform_indices = @transform_2, window_bounds = array<i64: 64, 1>}, {pipeline_mode = #tpu.pipeline_mode<synchronous>, transform_indices = @transform_3, window_bounds = array<i64: 32, 48>}, {pipeline_mode = #tpu.pipeline_mode<synchronous>, transform_indices = @transform_4, window_bounds = array<i64: 32, 1>}, {pipeline_mode = #tpu.pipeline_mode<synchronous>, transform_indices = @transform_5, window_bounds = array<i64: 64, 128>}, {pipeline_mode = #tpu.pipeline_mode<synchronous>, transform_indices = @transform_6, window_bounds = array<i64: 64, 1>}, {pipeline_mode = #tpu.pipeline_mode<synchronous>, transform_indices = @transform_7, window_bounds = array<i64: 4, 64>}, {pipeline_mode = #tpu.pipeline_mode<synchronous>, transform_indices = @transform_8, window_bounds = array<i64: 4, 1>}, {transform_indices = @transform_9, window_bounds = array<i64: 1, 4, 2>}]} {
    %c0 = arith.constant 0 : index
    %c0_0 = arith.constant 0 : index
    %c0_1 = arith.constant 0 : index
    %0 = vector.load %arg1[%c0, %c0_0, %c0_1] : memref<1x4x8xf32, #tpu.memory_space<vmem>>, vector<1x4x8xf32>
    %1 = vector.shape_cast %0 : vector<1x4x8xf32> to vector<4x8xf32>
    %2 = vector.extract_strided_slice %1 {offsets = [0, 0], sizes = [1, 8], strides = [1, 1]} : vector<4x8xf32> to vector<1x8xf32>
    %3 = vector.extract_strided_slice %1 {offsets = [3, 0], sizes = [1, 8], strides = [1, 1]} : vector<4x8xf32> to vector<1x8xf32>
    %cst = arith.constant 0.000000e+00 : f32
    %4 = vector.broadcast %cst : f32 to vector<1x2xf32>
    %5 = vector.extract_strided_slice %3 {offsets = [0, 0], sizes = [1, 6], strides = [1, 1]} : vector<1x8xf32> to vector<1x6xf32>
    %6 = tpu.concatenate %4, %5 in 1 : vector<1x2xf32>, vector<1x6xf32> -> vector<1x8xf32>
    %7 = vector.extract_strided_slice %2 {offsets = [0, 2], sizes = [1, 6], strides = [1, 1]} : vector<1x8xf32> to vector<1x6xf32>
    %8 = tpu.concatenate %7, %4 in 1 : vector<1x6xf32>, vector<1x2xf32> -> vector<1x8xf32>
    %9 = tpu.concatenate %6, %1, %8 in 0 : vector<1x8xf32>, vector<4x8xf32>, vector<1x8xf32> -> vector<6x8xf32>
    %c0_2 = arith.constant 0 : index
    %c0_3 = arith.constant 0 : index
    %10 = vector.load %arg2[%c0_2, %c0_3] : memref<64x6xf32, #tpu.memory_space<vmem>>, vector<64x6xf32>
    %cst_4 = arith.constant dense<0.000000e+00> : vector<64x8xf32>
    %11 = tpu.matmul %10, %9, %cst_4 {dimension_numbers = #tpu.dot_dimension_numbers<[1], [0], [0], [1], [0, 0, 1, 1], [], []>} : vector<64x6xf32>, vector<6x8xf32>, vector<64x8xf32> -> vector<64x8xf32>
    %c0_5 = arith.constant 0 : index
    %c0_6 = arith.constant 0 : index
    %12 = vector.load %arg3[%c0_5, %c0_6] : memref<64x1xf32, #tpu.memory_space<vmem>>, vector<64x1xf32>
    %13 = vector.broadcast %12 : vector<64x1xf32> to vector<64x8xf32>
    %14 = arith.addf %11, %13 : vector<64x8xf32>
    %cst_7 = arith.constant 0.000000e+00 : f32
    %15 = vector.broadcast %cst_7 : f32 to vector<64x8xf32>
    %16 = arith.maximumf %14, %15 : vector<64x8xf32>
    %17 = vector.extract_strided_slice %16 {offsets = [0, 0], sizes = [16, 8], strides = [1, 1]} : vector<64x8xf32> to vector<16x8xf32>
    %18 = vector.extract_strided_slice %16 {offsets = [16, 0], sizes = [16, 8], strides = [1, 1]} : vector<64x8xf32> to vector<16x8xf32>
    %19 = arith.maximumf %17, %18 : vector<16x8xf32>
    %20 = vector.extract_strided_slice %16 {offsets = [32, 0], sizes = [16, 8], strides = [1, 1]} : vector<64x8xf32> to vector<16x8xf32>
    %21 = vector.extract_strided_slice %16 {offsets = [48, 0], sizes = [16, 8], strides = [1, 1]} : vector<64x8xf32> to vector<16x8xf32>
    %22 = arith.maximumf %20, %21 : vector<16x8xf32>
    %cst_8 = arith.constant 0.000000e+00 : f32
    %23 = vector.broadcast %cst_8 : f32 to vector<16x2xf32>
    %24 = vector.extract_strided_slice %22 {offsets = [0, 0], sizes = [16, 6], strides = [1, 1]} : vector<16x8xf32> to vector<16x6xf32>
    %25 = tpu.concatenate %23, %24 in 1 : vector<16x2xf32>, vector<16x6xf32> -> vector<16x8xf32>
    %26 = vector.extract_strided_slice %19 {offsets = [0, 2], sizes = [16, 6], strides = [1, 1]} : vector<16x8xf32> to vector<16x6xf32>
    %27 = tpu.concatenate %26, %23 in 1 : vector<16x6xf32>, vector<16x2xf32> -> vector<16x8xf32>
    %28 = tpu.concatenate %25, %19, %22, %27 in 0 : vector<16x8xf32>, vector<16x8xf32>, vector<16x8xf32>, vector<16x8xf32> -> vector<64x8xf32>
    %c0_9 = arith.constant 0 : index
    %c0_10 = arith.constant 0 : index
    %29 = vector.load %arg4[%c0_9, %c0_10] : memref<32x48xf32, #tpu.memory_space<vmem>>, vector<32x48xf32>
    %30 = vector.extract_strided_slice %28 {offsets = [0, 0], sizes = [48, 8], strides = [1, 1]} : vector<64x8xf32> to vector<48x8xf32>
    %cst_11 = arith.constant dense<0.000000e+00> : vector<32x8xf32>
    %31 = tpu.matmul %29, %30, %cst_11 {dimension_numbers = #tpu.dot_dimension_numbers<[1], [0], [0], [1], [0, 0, 1, 1], [], []>} : vector<32x48xf32>, vector<48x8xf32>, vector<32x8xf32> -> vector<32x8xf32>
    %32 = vector.extract_strided_slice %28 {offsets = [16, 0], sizes = [48, 8], strides = [1, 1]} : vector<64x8xf32> to vector<48x8xf32>
    %cst_12 = arith.constant dense<0.000000e+00> : vector<32x8xf32>
    %33 = tpu.matmul %29, %32, %cst_12 {dimension_numbers = #tpu.dot_dimension_numbers<[1], [0], [0], [1], [0, 0, 1, 1], [], []>} : vector<32x48xf32>, vector<48x8xf32>, vector<32x8xf32> -> vector<32x8xf32>
    %34 = arith.maximumf %31, %33 : vector<32x8xf32>
    %c0_13 = arith.constant 0 : index
    %c0_14 = arith.constant 0 : index
    %35 = vector.load %arg5[%c0_13, %c0_14] : memref<32x1xf32, #tpu.memory_space<vmem>>, vector<32x1xf32>
    %36 = vector.broadcast %35 : vector<32x1xf32> to vector<32x8xf32>
    %37 = arith.addf %34, %36 : vector<32x8xf32>
    %cst_15 = arith.constant 0.000000e+00 : f32
    %38 = vector.broadcast %cst_15 : f32 to vector<32x8xf32>
    %39 = arith.maximumf %37, %38 : vector<32x8xf32>
    %40 = vector.extract_strided_slice %39 {offsets = [0, 0], sizes = [32, 2], strides = [1, 1]} : vector<32x8xf32> to vector<32x2xf32>
    %41 = vector.extract_strided_slice %39 {offsets = [0, 2], sizes = [32, 2], strides = [1, 1]} : vector<32x8xf32> to vector<32x2xf32>
    %42 = vector.extract_strided_slice %39 {offsets = [0, 4], sizes = [32, 2], strides = [1, 1]} : vector<32x8xf32> to vector<32x2xf32>
    %43 = vector.extract_strided_slice %39 {offsets = [0, 6], sizes = [32, 2], strides = [1, 1]} : vector<32x8xf32> to vector<32x2xf32>
    %44 = tpu.concatenate %40, %41, %42, %43 in 0 : vector<32x2xf32>, vector<32x2xf32>, vector<32x2xf32>, vector<32x2xf32> -> vector<128x2xf32>
    %c0_16 = arith.constant 0 : index
    %c0_17 = arith.constant 0 : index
    %45 = vector.load %arg6[%c0_16, %c0_17] : memref<64x128xf32, #tpu.memory_space<vmem>>, vector<64x128xf32>
    %cst_18 = arith.constant dense<0.000000e+00> : vector<64x2xf32>
    %46 = tpu.matmul %45, %44, %cst_18 {dimension_numbers = #tpu.dot_dimension_numbers<[1], [0], [0], [1], [0, 0, 1, 1], [], []>} : vector<64x128xf32>, vector<128x2xf32>, vector<64x2xf32> -> vector<64x2xf32>
    %c0_19 = arith.constant 0 : index
    %c0_20 = arith.constant 0 : index
    %47 = vector.load %arg7[%c0_19, %c0_20] : memref<64x1xf32, #tpu.memory_space<vmem>>, vector<64x1xf32>
    %48 = vector.broadcast %47 : vector<64x1xf32> to vector<64x2xf32>
    %49 = arith.addf %46, %48 : vector<64x2xf32>
    %cst_21 = arith.constant 0.000000e+00 : f32
    %50 = vector.broadcast %cst_21 : f32 to vector<64x2xf32>
    %51 = arith.maximumf %49, %50 : vector<64x2xf32>
    %c0_22 = arith.constant 0 : index
    %c0_23 = arith.constant 0 : index
    %52 = vector.load %arg8[%c0_22, %c0_23] : memref<4x64xf32, #tpu.memory_space<vmem>>, vector<4x64xf32>
    %cst_24 = arith.constant dense<0.000000e+00> : vector<4x2xf32>
    %53 = tpu.matmul %52, %51, %cst_24 {dimension_numbers = #tpu.dot_dimension_numbers<[1], [0], [0], [1], [0, 0, 1, 1], [], []>} : vector<4x64xf32>, vector<64x2xf32>, vector<4x2xf32> -> vector<4x2xf32>
    %c0_25 = arith.constant 0 : index
    %c0_26 = arith.constant 0 : index
    %54 = vector.load %arg9[%c0_25, %c0_26] : memref<4x1xf32, #tpu.memory_space<vmem>>, vector<4x1xf32>
    %55 = vector.broadcast %54 : vector<4x1xf32> to vector<4x2xf32>
    %56 = arith.addf %53, %55 : vector<4x2xf32>
    %c0_27 = arith.constant 0 : index
    %c0_28 = arith.constant 0 : index
    %c0_29 = arith.constant 0 : index
    %57 = vector.load %arg10[%c0_27, %c0_28, %c0_29] : memref<1x4x2xf32, #tpu.memory_space<vmem>>, vector<1x4x2xf32>
    %58 = vector.shape_cast %57 : vector<1x4x2xf32> to vector<4x2xf32>
    %59 = vector.shape_cast %56 : vector<4x2xf32> to vector<1x4x2xf32>
    tpu.vector_store %arg10[%c0_27, %c0_28, %c0_29], %59 {strides = array<i32>} : memref<1x4x2xf32, #tpu.memory_space<vmem>>, vector<1x4x2xf32>,
    return
  }
  func.func @transform_0(%arg0: i32) -> (i32, i32, i32) {
    %c0_i32 = arith.constant 0 : i32
    %c0_i32_0 = arith.constant 0 : i32
    %c0_i32_1 = arith.constant 0 : i32
    return %arg0, %c0_i32, %c0_i32_0 : i32, i32, i32
  }
  func.func @transform_1(%arg0: i32) -> (i32, i32) {
    %c0_i32 = arith.constant 0 : i32
    %c0_i32_0 = arith.constant 0 : i32
    %c0_i32_1 = arith.constant 0 : i32
    return %c0_i32, %c0_i32_0 : i32, i32
  }
  func.func @transform_2(%arg0: i32) -> (i32, i32) {
    %c0_i32 = arith.constant 0 : i32
    %c0_i32_0 = arith.constant 0 : i32
    %c0_i32_1 = arith.constant 0 : i32
    return %c0_i32, %c0_i32_0 : i32, i32
  }
  func.func @transform_3(%arg0: i32) -> (i32, i32) {
    %c0_i32 = arith.constant 0 : i32
    %c0_i32_0 = arith.constant 0 : i32
    %c0_i32_1 = arith.constant 0 : i32
    return %c0_i32, %c0_i32_0 : i32, i32
  }
  func.func @transform_4(%arg0: i32) -> (i32, i32) {
    %c0_i32 = arith.constant 0 : i32
    %c0_i32_0 = arith.constant 0 : i32
    %c0_i32_1 = arith.constant 0 : i32
    return %c0_i32, %c0_i32_0 : i32, i32
  }
  func.func @transform_5(%arg0: i32) -> (i32, i32) {
    %c0_i32 = arith.constant 0 : i32
    %c0_i32_0 = arith.constant 0 : i32
    %c0_i32_1 = arith.constant 0 : i32
    return %c0_i32, %c0_i32_0 : i32, i32
  }
  func.func @transform_6(%arg0: i32) -> (i32, i32) {
    %c0_i32 = arith.constant 0 : i32
    %c0_i32_0 = arith.constant 0 : i32
    %c0_i32_1 = arith.constant 0 : i32
    return %c0_i32, %c0_i32_0 : i32, i32
  }
  func.func @transform_7(%arg0: i32) -> (i32, i32) {
    %c0_i32 = arith.constant 0 : i32
    %c0_i32_0 = arith.constant 0 : i32
    %c0_i32_1 = arith.constant 0 : i32
    return %c0_i32, %c0_i32_0 : i32, i32
  }
  func.func @transform_8(%arg0: i32) -> (i32, i32) {
    %c0_i32 = arith.constant 0 : i32
    %c0_i32_0 = arith.constant 0 : i32
    %c0_i32_1 = arith.constant 0 : i32
    return %c0_i32, %c0_i32_0 : i32, i32
  }
  func.func @transform_9(%arg0: i32) -> (i32, i32, i32) {
    %c0_i32 = arith.constant 0 : i32
    %c0_i32_0 = arith.constant 0 : i32
    %c0_i32_1 = arith.constant 0 : i32
    return %arg0, %c0_i32, %c0_i32_0 : i32, i32, i32
  }
}

</mosaic_0001>

<llo_original>
// kernel: tile.8
$region0: #{tile.8}
  #allocation0 [shape = 's32[1]{0}', space=sflag, size = 0x4, scoped, tag = 'scoped memory for tile.8']
  %s0 = inlined_call_operand.vmem [shape: f32[16], index: 0, kind: input, shape index: {}]
  %s1 = inlined_call_operand.vmem [shape: f32[4,16], index: 1, kind: output, shape index: {}]
  // Predicated region
  $region2: #{tile.8} parent=0 // pred_check
    _
  $region3: #{tile.8} parent=0 // pred_check_branch
    %3 = sbr.rel (0) target = $region5
  $region4: #{tile.8} parent=0 // pred_region
    _
  $region5: #{tile.8} parent=0 // pred_fallthru
    _
  %v4 = vld [vmem:[%s0] ss:$0 sm:$0xff]
  %5 = vst [vmem:[%s1] sm:$0xf] %v4

// kernel: tile.0
$region0: #{tile.0}
  %s0 = inlined_call_operand.vmem [shape: f32[4,16], index: 0, kind: input, shape index: {}]
  %s1 = inlined_call_operand.vmem [shape: f32[64,1], index: 1, kind: output, shape index: {}]
  $region1: #{tile.0} parent=0
    #allocation0 [shape = 'u8[4096]{0}', space=vmem, size = 0x1000, scoped, tag = 'scoped mem for input reshape']
    %s3 = sshllo.u32 0, 4
    %v4 = vld [vmem:[%s0] sm:%s3]
    %5 = vst [vmem:[#allocation0] sm:%s3] %v4
    %v6 = vld [vmem:[#allocation0] sm:$0xf]
    %vm7 = vcmask 7168
    %8 = vst.msk [vmem:[%s1] ss:$16 sm:$0x3] %vm7, %v6
    %9 = vst.msk [vmem:[%s1] ss:$16 sm:$0xc] %vm7, %v6
    %v10 = vld [vmem:[#allocation0] sm:$0xf]
    %11 = vrot.lane.b32.xlu0 %v10, 127
    %v12 = vpop.permute.xlu0 %11
    %vm13 = vcmask 7168
    %s14 = scalar_lea.vmem %s1, 1
    %15 = vst.msk [vmem:[%s14] ss:$16 sm:$0x3] %vm13, %v12
    %s16 = scalar_lea.vmem %s1, 1
    %17 = vst.msk [vmem:[%s16] ss:$16 sm:$0xc] %vm13, %v12
    %v18 = vld [vmem:[#allocation0] sm:$0xf]
    %19 = vrot.lane.b32.xlu0 %v18, 126
    %v20 = vpop.permute.xlu0 %19
    %vm21 = vcmask 7168
    %s22 = scalar_lea.vmem %s1, 2
    %23 = vst.msk [vmem:[%s22] ss:$16 sm:$0x3] %vm21, %v20
    %s24 = scalar_lea.vmem %s1, 2
    %25 = vst.msk [vmem:[%s24] ss:$16 sm:$0xc] %vm21, %v20
    %v26 = vld [vmem:[#allocation0] sm:$0xf]
    %27 = vrot.lane.b32.xlu0 %v26, 125
    %v28 = vpop.permute.xlu0 %27
    %vm29 = vcmask 7168
    %s30 = scalar_lea.vmem %s1, 3
    %31 = vst.msk [vmem:[%s30] ss:$16 sm:$0x3] %vm29, %v28
    %s32 = scalar_lea.vmem %s1, 3
    %33 = vst.msk [vmem:[%s32] ss:$16 sm:$0xc] %vm29, %v28
    %v34 = vld [vmem:[#allocation0] sm:$0xf]
    %35 = vrot.lane.b32.xlu0 %v34, 124
    %v36 = vpop.permute.xlu0 %35
    %vm37 = vcmask 7168
    %s38 = scalar_lea.vmem %s1, 4
    %39 = vst.msk [vmem:[%s38] ss:$16 sm:$0x3] %vm37, %v36
    %s40 = scalar_lea.vmem %s1, 4
    %41 = vst.msk [vmem:[%s40] ss:$16 sm:$0xc] %vm37, %v36
    %v42 = vld [vmem:[#allocation0] sm:$0xf]
    %43 = vrot.lane.b32.xlu0 %v42, 123
    %v44 = vpop.permute.xlu0 %43
    %vm45 = vcmask 7168
    %s46 = scalar_lea.vmem %s1, 5
    %47 = vst.msk [vmem:[%s46] ss:$16 sm:$0x3] %vm45, %v44
    %s48 = scalar_lea.vmem %s1, 5
    %49 = vst.msk [vmem:[%s48] ss:$16 sm:$0xc] %vm45, %v44
    %v50 = vld [vmem:[#allocation0] sm:$0xf]
    %51 = vrot.lane.b32.xlu0 %v50, 122
    %v52 = vpop.permute.xlu0 %51
    %vm53 = vcmask 7168
    %s54 = scalar_lea.vmem %s1, 6
    %55 = vst.msk [vmem:[%s54] ss:$16 sm:$0x3] %vm53, %v52
    %s56 = scalar_lea.vmem %s1, 6
    %57 = vst.msk [vmem:[%s56] ss:$16 sm:$0xc] %vm53, %v52
    %v58 = vld [vmem:[#allocation0] sm:$0xf]
    %59 = vrot.lane.b32.xlu0 %v58, 121
    %v60 = vpop.permute.xlu0 %59
    %vm61 = vcmask 7168
    %s62 = scalar_lea.vmem %s1, 7
    %63 = vst.msk [vmem:[%s62] ss:$16 sm:$0x3] %vm61, %v60
    %s64 = scalar_lea.vmem %s1, 7
    %65 = vst.msk [vmem:[%s64] ss:$16 sm:$0xc] %vm61, %v60
    %v66 = vld [vmem:[#allocation0] sm:$0xf]
    %67 = vrot.lane.b32.xlu0 %v66, 120
    %v68 = vpop.permute.xlu0 %67
    %vm69 = vcmask 7168
    %s70 = scalar_lea.vmem %s1, 8
    %71 = vst.msk [vmem:[%s70] ss:$16 sm:$0x3] %vm69, %v68
    %s72 = scalar_lea.vmem %s1, 8
    %73 = vst.msk [vmem:[%s72] ss:$16 sm:$0xc] %vm69, %v68
    %v74 = vld [vmem:[#allocation0] sm:$0xf]
    %75 = vrot.lane.b32.xlu0 %v74, 119
    %v76 = vpop.permute.xlu0 %75
    %vm77 = vcmask 7168
    %s78 = scalar_lea.vmem %s1, 9
    %79 = vst.msk [vmem:[%s78] ss:$16 sm:$0x3] %vm77, %v76
    %s80 = scalar_lea.vmem %s1, 9
    %81 = vst.msk [vmem:[%s80] ss:$16 sm:$0xc] %vm77, %v76
    %v82 = vld [vmem:[#allocation0] sm:$0xf]
    %83 = vrot.lane.b32.xlu0 %v82, 118
    %v84 = vpop.permute.xlu0 %83
    %vm85 = vcmask 7168
    %s86 = scalar_lea.vmem %s1, 10
    %87 = vst.msk [vmem:[%s86] ss:$16 sm:$0x3] %vm85, %v84
    %s88 = scalar_lea.vmem %s1, 10
    %89 = vst.msk [vmem:[%s88] ss:$16 sm:$0xc] %vm85, %v84
    %v90 = vld [vmem:[#allocation0] sm:$0xf]
    %91 = vrot.lane.b32.xlu0 %v90, 117
    %v92 = vpop.permute.xlu0 %91
    %vm93 = vcmask 7168
    %s94 = scalar_lea.vmem %s1, 11
    %95 = vst.msk [vmem:[%s94] ss:$16 sm:$0x3] %vm93, %v92
    %s96 = scalar_lea.vmem %s1, 11
    %97 = vst.msk [vmem:[%s96] ss:$16 sm:$0xc] %vm93, %v92
    %v98 = vld [vmem:[#allocation0] sm:$0xf]
    %99 = vrot.lane.b32.xlu0 %v98, 116
    %v100 = vpop.permute.xlu0 %99
    %vm101 = vcmask 7168
    %s102 = scalar_lea.vmem %s1, 12
    %103 = vst.msk [vmem:[%s102] ss:$16 sm:$0x3] %vm101, %v100
    %s104 = scalar_lea.vmem %s1, 12
    %105 = vst.msk [vmem:[%s104] ss:$16 sm:$0xc] %vm101, %v100
    %v106 = vld [vmem:[#allocation0] sm:$0xf]
    %107 = vrot.lane.b32.xlu0 %v106, 115
    %v108 = vpop.permute.xlu0 %107
    %vm109 = vcmask 7168
    %s110 = scalar_lea.vmem %s1, 13
    %111 = vst.msk [vmem:[%s110] ss:$16 sm:$0x3] %vm109, %v108
    %s112 = scalar_lea.vmem %s1, 13
    %113 = vst.msk [vmem:[%s112] ss:$16 sm:$0xc] %vm109, %v108
    %v114 = vld [vmem:[#allocation0] sm:$0xf]
    %115 = vrot.lane.b32.xlu0 %v114, 114
    %v116 = vpop.permute.xlu0 %115
    %vm117 = vcmask 7168
    %s118 = scalar_lea.vmem %s1, 14
    %119 = vst.msk [vmem:[%s118] ss:$16 sm:$0x3] %vm117, %v116
    %s120 = scalar_lea.vmem %s1, 14
    %121 = vst.msk [vmem:[%s120] ss:$16 sm:$0xc] %vm117, %v116
    %v122 = vld [vmem:[#allocation0] sm:$0xf]
    %123 = vrot.lane.b32.xlu0 %v122, 113
    %v124 = vpop.permute.xlu0 %123
    %vm125 = vcmask 7168
    %s126 = scalar_lea.vmem %s1, 15
    %127 = vst.msk [vmem:[%s126] ss:$16 sm:$0x3] %vm125, %v124
    %s128 = scalar_lea.vmem %s1, 15
    %129 = vst.msk [vmem:[%s128] ss:$16 sm:$0xc] %vm125, %v124

// kernel: cnn_forward.1
$region0: #{cnn_forward.1}
  #allocation0 [shape = 'u32[]', space=smem, size = 0x4, offset = 0x4, fixed_abs, tag = 'smem constant byte address 0x4 - core index']
  #allocation1 [shape = 'u32[144,128]{1,0:T(1,128)}', space=vmem, size = 0x12000, scoped, tag = 'internal scratch']
  %s0 = inlined_call_operand.vmem [shape: f32[1,4,8], index: 0, kind: input, shape index: {}]
  %s1 = inlined_call_operand.vmem [shape: f32[64,6], index: 1, kind: input, shape index: {}]
  %s2 = inlined_call_operand.vmem [shape: f32[64,1], index: 2, kind: input, shape index: {}]
  %s3 = inlined_call_operand.vmem [shape: f32[32,48], index: 3, kind: input, shape index: {}]
  %s4 = inlined_call_operand.vmem [shape: f32[32,1], index: 4, kind: input, shape index: {}]
  %s5 = inlined_call_operand.vmem [shape: f32[64,128], index: 5, kind: input, shape index: {}]
  %s6 = inlined_call_operand.vmem [shape: f32[64,1], index: 6, kind: input, shape index: {}]
  %s7 = inlined_call_operand.vmem [shape: f32[4,64], index: 7, kind: input, shape index: {}]
  %s8 = inlined_call_operand.vmem [shape: f32[4,1], index: 8, kind: input, shape index: {}]
  %s9 = inlined_call_operand.vmem [shape: f32[1,4,2], index: 9, kind: output, shape index: {}]
  %s10 = sld [smem:[#allocation0]]
  $region46: #{cnn_forward.1} parent=0
    _
  %s12 = ssub.s32 1, %s10
  %s13 = scalar_select 0, %s12, %s10
  // Predicated region
  $region2: #{cnn_forward.1} parent=0 // pred_check
    _
  $region3: #{cnn_forward.1} parent=0 // pred_check_branch
    %15 = sbr.rel (0) target = $region5
  $region4: #{cnn_forward.1} parent=0 // pred_region
    _
  $region5: #{cnn_forward.1} parent=0 // pred_fallthru
    _
  // Predicated region
  $region6: #{cnn_forward.1} parent=0 // pred_check
    _
  $region7: #{cnn_forward.1} parent=0 // pred_check_branch
    %17 = sbr.rel (0) target = $region9
  $region8: #{cnn_forward.1} parent=0 // pred_region
    _
  $region9: #{cnn_forward.1} parent=0 // pred_fallthru
    _
  // Predicated region
  $region10: #{cnn_forward.1} parent=0 // pred_check
    _
  $region11: #{cnn_forward.1} parent=0 // pred_check_branch
    %19 = sbr.rel (0) target = $region13
  $region12: #{cnn_forward.1} parent=0 // pred_region
    _
  $region13: #{cnn_forward.1} parent=0 // pred_fallthru
    _
  // Predicated region
  $region14: #{cnn_forward.1} parent=0 // pred_check
    _
  $region15: #{cnn_forward.1} parent=0 // pred_check_branch
    %21 = sbr.rel (0) target = $region17
  $region16: #{cnn_forward.1} parent=0 // pred_region
    _
  $region17: #{cnn_forward.1} parent=0 // pred_fallthru
    _
  // Predicated region
  $region18: #{cnn_forward.1} parent=0 // pred_check
    _
  $region19: #{cnn_forward.1} parent=0 // pred_check_branch
    %23 = sbr.rel (0) target = $region21
  $region20: #{cnn_forward.1} parent=0 // pred_region
    _
  $region21: #{cnn_forward.1} parent=0 // pred_fallthru
    _
  // Predicated region
  $region22: #{cnn_forward.1} parent=0 // pred_check
    _
  $region23: #{cnn_forward.1} parent=0 // pred_check_branch
    %25 = sbr.rel (0) target = $region25
  $region24: #{cnn_forward.1} parent=0 // pred_region
    _
  $region25: #{cnn_forward.1} parent=0 // pred_fallthru
    _
  // Predicated region
  $region26: #{cnn_forward.1} parent=0 // pred_check
    _
  $region27: #{cnn_forward.1} parent=0 // pred_check_branch
    %27 = sbr.rel (0) target = $region29
  $region28: #{cnn_forward.1} parent=0 // pred_region
    _
  $region29: #{cnn_forward.1} parent=0 // pred_fallthru
    _
  // Predicated region
  $region30: #{cnn_forward.1} parent=0 // pred_check
    _
  $region31: #{cnn_forward.1} parent=0 // pred_check_branch
    %29 = sbr.rel (0) target = $region33
  $region32: #{cnn_forward.1} parent=0 // pred_region
    _
  $region33: #{cnn_forward.1} parent=0 // pred_fallthru
    _
  // Predicated region
  $region34: #{cnn_forward.1} parent=0 // pred_check
    _
  $region35: #{cnn_forward.1} parent=0 // pred_check_branch
    %31 = sbr.rel (0) target = $region37
  $region36: #{cnn_forward.1} parent=0 // pred_region
    _
  $region37: #{cnn_forward.1} parent=0 // pred_fallthru
    _
  %v32 = vld [vmem:[%s0] sm:$0xf]
  %v34 = vrot.slane %v32, 3
  %35 = vrot.lane.b32.xlu0 %v34, 2
  %v36 = vpop.permute.xlu0 %35
  %vm38 = vcmask 15360
  %v39 = vsel %vm38, 0.0, %v36
  %40 = vrot.lane.b32.xlu0 %v32, 126
  %v41 = vpop.permute.xlu0 %40
  %vm43 = vcmask 48128
  %v44 = vsel %vm43, %v41, 0.0
  %v45 = vrot.slane %v32, 7
  %v48 = vrot.slane %v44, 3
  %vm50 = vcmask 1040384
  %v51 = vsel %vm50, %v39, %v45
  %vm52 = vcmask 1044480
  %v53 = vsel %vm52, %v51, %v48
  %v54 = vld [vmem:[%s1] sm:$0xff]
  %v55 = vld [vmem:[%s1 + $0x8] sm:$0xff]
  %v56 = vld [vmem:[%s1 + $0x10] sm:$0xff]
  %v57 = vld [vmem:[%s1 + $0x18] sm:$0xff]
  %v58 = vld [vmem:[%s1 + $0x20] sm:$0xff]
  %v59 = vld [vmem:[%s1 + $0x28] sm:$0xff]
  %v60 = vld [vmem:[%s1 + $0x30] sm:$0xff]
  %v61 = vld [vmem:[%s1 + $0x38] sm:$0xff]
  %v62 = vld [vmem:[%s2] sm:$0xff]
  %v63 = vld [vmem:[%s2 + $0x8] sm:$0xff]
  %v64 = vld [vmem:[%s2 + $0x10] sm:$0xff]
  %v65 = vld [vmem:[%s2 + $0x18] sm:$0xff]
  %v66 = vld [vmem:[%s2 + $0x20] sm:$0xff]
  %v67 = vld [vmem:[%s2 + $0x28] sm:$0xff]
  %v68 = vld [vmem:[%s2 + $0x30] sm:$0xff]
  %v69 = vld [vmem:[%s2 + $0x38] sm:$0xff]
  %71 = vset.pattern.permute.xlu0 0
  %72 = vperm.xlu0 %71, %v62
  %v73 = vpop.permute.xlu0 %72
  %76 = vset.pattern.permute.xlu0 0
  %77 = vperm.xlu0 %76, %v63
  %v78 = vpop.permute.xlu0 %77
  %81 = vset.pattern.permute.xlu0 0
  %82 = vperm.xlu0 %81, %v64
  %v83 = vpop.permute.xlu0 %82
  %86 = vset.pattern.permute.xlu0 0
  %87 = vperm.xlu0 %86, %v65
  %v88 = vpop.permute.xlu0 %87
  %91 = vset.pattern.permute.xlu0 0
  %92 = vperm.xlu0 %91, %v66
  %v93 = vpop.permute.xlu0 %92
  %96 = vset.pattern.permute.xlu0 0
  %97 = vperm.xlu0 %96, %v67
  %v98 = vpop.permute.xlu0 %97
  %101 = vset.pattern.permute.xlu0 0
  %102 = vperm.xlu0 %101, %v68
  %v103 = vpop.permute.xlu0 %102
  %106 = vset.pattern.permute.xlu0 0
  %107 = vperm.xlu0 %106, %v69
  %v108 = vpop.permute.xlu0 %107
  %v111 = vsel %vm43, %v54, 0
  %v114 = vsel %vm43, %v55, 0
  %v117 = vsel %vm43, %v56, 0
  %v120 = vsel %vm43, %v57, 0
  %v123 = vsel %vm43, %v58, 0
  %v126 = vsel %vm43, %v59, 0
  %v129 = vsel %vm43, %v60, 0
  %v132 = vsel %vm43, %v61, 0
  %vm134 = vcmask 1045504
  %v136 = vsel %vm134, %v53, 0
  %138 = vmatprep.subr.mxu0 0.0
  %139 = vmatpush1.msra.mxu0 %v136
  %140 = vmatprep.subr.mxu0 0.0
  %141 = vmatpush1.msra.mxu0 0.0
  %142 = vmatprep.subr.mxu0 0.0
  %143 = vmatpush1.msra.mxu0 0.0
  %144 = vmatprep.subr.mxu0 0.0
  %145 = vmatpush1.msra.mxu0 0.0
  %146 = vmatprep.subr.mxu0 0.0
  %147 = vmatpush1.msra.mxu0 0.0
  %148 = vmatprep.subr.mxu0 0.0
  %149 = vmatpush1.msra.mxu0 0.0
  %150 = vmatprep.subr.mxu0 0.0
  %151 = vmatpush1.msra.mxu0 0.0
  %152 = vmatprep.subr.mxu0 0.0
  %153 = vmatpush1.msra.mxu0 0.0
  %154 = vmatprep.subr.mxu0 0.0
  %155 = vmatpush1.msra.mxu0 0.0
  %156 = vmatprep.subr.mxu0 0.0
  %157 = vmatpush1.msra.mxu0 0.0
  %158 = vmatprep.subr.mxu0 0.0
  %159 = vmatpush1.msra.mxu0 0.0
  %160 = vmatprep.subr.mxu0 0.0
  %161 = vmatpush1.msra.mxu0 0.0
  %162 = vmatprep.subr.mxu0 0.0
  %163 = vmatpush1.msra.mxu0 0.0
  %164 = vmatprep.subr.mxu0 0.0
  %165 = vmatpush1.msra.mxu0 0.0
  %166 = vmatprep.subr.mxu0 0.0
  %167 = vmatpush1.msra.mxu0 0.0
  %168 = vmatprep.subr.mxu0 0.0
  %169 = vmatpush1.msra.mxu0 0.0
  %170 = vmatprep.subr.mxu0 0.0
  %171 = vmatpush1.msra.mxu0 0.0
  %172 = vmatprep.subr.mxu0 0.0
  %173 = vmatpush1.msra.mxu0 0.0
  %174 = vmatprep.subr.mxu0 0.0
  %175 = vmatpush1.msra.mxu0 0.0
  %176 = vmatprep.subr.mxu0 0.0
  %177 = vmatpush1.msra.mxu0 0.0
  %178 = vmatprep.subr.mxu0 0.0
  %179 = vmatpush1.msra.mxu0 0.0
  %180 = vmatprep.subr.mxu0 0.0
  %181 = vmatpush1.msra.mxu0 0.0
  %182 = vmatprep.subr.mxu0 0.0
  %183 = vmatpush1.msra.mxu0 0.0
  %184 = vmatprep.subr.mxu0 0.0
  %185 = vmatpush1.msra.mxu0 0.0
  %186 = vmatprep.subr.mxu0 0.0
  %187 = vmatpush1.msra.mxu0 0.0
  %188 = vmatprep.subr.mxu0 0.0
  %189 = vmatpush1.msra.mxu0 0.0
  %190 = vmatprep.subr.mxu0 0.0
  %191 = vmatpush1.msra.mxu0 0.0
  %192 = vmatprep.subr.mxu0 0.0
  %193 = vmatpush1.msra.mxu0 0.0
  %194 = vmatprep.subr.mxu0 0.0
  %195 = vmatpush1.msra.mxu0 0.0
  %196 = vmatprep.subr.mxu0 0.0
  %197 = vmatpush1.msra.mxu0 0.0
  %198 = vmatprep.subr.mxu0 0.0
  %199 = vmatpush1.msra.mxu0 0.0
  %200 = vmatprep.subr.mxu0 0.0
  %201 = vmatpush1.msra.mxu0 0.0
  %202 = vmatprep.mubr.f32.mxu0 0.0
  %203 = vmatmul.mubr.f32.gmra.mrb[0].mxu0 %v111
  %v204 = vpop.f32.mrb[0].mxu0
  %v205 = vadd.f32 %v73, %v204
  %v206 = vpop.f32.mrb[0].mxu0
  %207 = vmatprep.mubr.f32.mxu0 0.0
  %208 = vmatmul.mubr.f32.gmra.mrb[0].mxu0 %v114
  %v209 = vpop.f32.mrb[0].mxu0
  %v210 = vadd.f32 %v78, %v209
  %v211 = vpop.f32.mrb[0].mxu0
  %212 = vmatprep.mubr.f32.mxu0 0.0
  %213 = vmatmul.mubr.f32.gmra.mrb[0].mxu0 %v117
  %v214 = vpop.f32.mrb[0].mxu0
  %v215 = vadd.f32 %v83, %v214
  %v216 = vpop.f32.mrb[0].mxu0
  %217 = vmatprep.mubr.f32.mxu0 0.0
  %218 = vmatmul.mubr.f32.gmra.mrb[0].mxu0 %v120
  %v219 = vpop.f32.mrb[0].mxu0
  %v220 = vadd.f32 %v88, %v219
  %v221 = vpop.f32.mrb[0].mxu0
  %222 = vmatprep.mubr.f32.mxu0 0.0
  %223 = vmatmul.mubr.f32.gmra.mrb[0].mxu0 %v123
  %v224 = vpop.f32.mrb[0].mxu0
  %v225 = vadd.f32 %v93, %v224
  %v226 = vpop.f32.mrb[0].mxu0
  %227 = vmatprep.mubr.f32.mxu0 0.0
  %228 = vmatmul.mubr.f32.gmra.mrb[0].mxu0 %v126
  %v229 = vpop.f32.mrb[0].mxu0
  %v230 = vadd.f32 %v98, %v229
  %v231 = vpop.f32.mrb[0].mxu0
  %232 = vmatprep.mubr.f32.mxu0 0.0
  %233 = vmatmul.mubr.f32.gmra.mrb[0].mxu0 %v129
  %v234 = vpop.f32.mrb[0].mxu0
  %v235 = vadd.f32 %v103, %v234
  %v236 = vpop.f32.mrb[0].mxu0
  %237 = vmatprep.mubr.f32.mxu0 0.0
  %238 = vmatmul.mubr.f32.gmra.mrb[0].mxu0 %v132
  %v239 = vpop.f32.mrb[0].mxu0
  %v240 = vadd.f32 %v108, %v239
  %v241 = vpop.f32.mrb[0].mxu0
  %242 = vdwg.mxu0
  %v243 = vmax.f32 %v205, 0.0
  %v244 = vmax.f32 %v210, 0.0
  %v245 = vmax.f32 %v215, 0.0
  %v246 = vmax.f32 %v220, 0.0
  %v247 = vmax.f32 %v225, 0.0
  %v248 = vmax.f32 %v230, 0.0
  %v249 = vmax.f32 %v235, 0.0
  %v250 = vmax.f32 %v240, 0.0
  %v251 = vmax.f32 %v243, %v245
  %v252 = vmax.f32 %v244, %v246
  %v253 = vmax.f32 %v247, %v249
  %v254 = vmax.f32 %v248, %v250
  %257 = vrot.lane.b32.xlu0 %v253, 2
  %v258 = vpop.permute.xlu0 %257
  %259 = vrot.lane.b32.xlu0 %v254, 2
  %v260 = vpop.permute.xlu0 %259
  %v263 = vsel %vm38, 0.0, %v258
  %v264 = vsel %vm38, 0.0, %v260
  %267 = vrot.lane.b32.xlu0 %v251, 126
  %v268 = vpop.permute.xlu0 %267
  %269 = vrot.lane.b32.xlu0 %v252, 126
  %v270 = vpop.permute.xlu0 %269
  %v273 = vsel %vm43, %v268, 0.0
  %v274 = vsel %vm43, %v270, 0.0
  %v275 = vld [vmem:[%s3] sm:$0xff]
  %v276 = vld [vmem:[%s3 + $0x8] sm:$0xff]
  %v277 = vld [vmem:[%s3 + $0x10] sm:$0xff]
  %v278 = vld [vmem:[%s3 + $0x18] sm:$0xff]
  %vm279 = vcmask 392192
  %v281 = vsel %vm279, %v275, 0
  %v284 = vsel %vm279, %v276, 0
  %v287 = vsel %vm279, %v277, 0
  %v290 = vsel %vm279, %v278, 0
  %292 = vmatprep.subr.mxu0 0.0
  %293 = vmatpush1.msra.mxu0 %v263
  %294 = vmatprep.subr.mxu0 0.0
  %295 = vmatpush1.msra.mxu0 %v264
  %296 = vmatprep.subr.mxu0 0.0
  %297 = vmatpush1.msra.mxu0 %v251
  %298 = vmatprep.subr.mxu0 0.0
  %299 = vmatpush1.msra.mxu0 %v252
  %300 = vmatprep.subr.mxu0 0.0
  %301 = vmatpush1.msra.mxu0 %v253
  %302 = vmatprep.subr.mxu0 0.0
  %303 = vmatpush1.msra.mxu0 %v254
  %304 = vmatprep.subr.mxu0 0.0
  %305 = vmatpush1.msra.mxu0 0.0
  %306 = vmatprep.subr.mxu0 0.0
  %307 = vmatpush1.msra.mxu0 0.0
  %308 = vmatprep.subr.mxu0 0.0
  %309 = vmatpush1.msra.mxu0 0.0
  %310 = vmatprep.subr.mxu0 0.0
  %311 = vmatpush1.msra.mxu0 0.0
  %312 = vmatprep.subr.mxu0 0.0
  %313 = vmatpush1.msra.mxu0 0.0
  %314 = vmatprep.subr.mxu0 0.0
  %315 = vmatpush1.msra.mxu0 0.0
  %316 = vmatprep.subr.mxu0 0.0
  %317 = vmatpush1.msra.mxu0 0.0
  %318 = vmatprep.subr.mxu0 0.0
  %319 = vmatpush1.msra.mxu0 0.0
  %320 = vmatprep.subr.mxu0 0.0
  %321 = vmatpush1.msra.mxu0 0.0
  %322 = vmatprep.subr.mxu0 0.0
  %323 = vmatpush1.msra.mxu0 0.0
  %324 = vmatprep.subr.mxu0 0.0
  %325 = vmatpush1.msra.mxu0 0.0
  %326 = vmatprep.subr.mxu0 0.0
  %327 = vmatpush1.msra.mxu0 0.0
  %328 = vmatprep.subr.mxu0 0.0
  %329 = vmatpush1.msra.mxu0 0.0
  %330 = vmatprep.subr.mxu0 0.0
  %331 = vmatpush1.msra.mxu0 0.0
  %332 = vmatprep.subr.mxu0 0.0
  %333 = vmatpush1.msra.mxu0 0.0
  %334 = vmatprep.subr.mxu0 0.0
  %335 = vmatpush1.msra.mxu0 0.0
  %336 = vmatprep.subr.mxu0 0.0
  %337 = vmatpush1.msra.mxu0 0.0
  %338 = vmatprep.subr.mxu0 0.0
  %339 = vmatpush1.msra.mxu0 0.0
  %340 = vmatprep.subr.mxu0 0.0
  %341 = vmatpush1.msra.mxu0 0.0
  %342 = vmatprep.subr.mxu0 0.0
  %343 = vmatpush1.msra.mxu0 0.0
  %344 = vmatprep.subr.mxu0 0.0
  %345 = vmatpush1.msra.mxu0 0.0
  %346 = vmatprep.subr.mxu0 0.0
  %347 = vmatpush1.msra.mxu0 0.0
  %348 = vmatprep.subr.mxu0 0.0
  %349 = vmatpush1.msra.mxu0 0.0
  %350 = vmatprep.subr.mxu0 0.0
  %351 = vmatpush1.msra.mxu0 0.0
  %352 = vmatprep.subr.mxu0 0.0
  %353 = vmatpush1.msra.mxu0 0.0
  %354 = vmatprep.subr.mxu0 0.0
  %355 = vmatpush1.msra.mxu0 0.0
  %356 = vmatprep.mubr.f32.mxu0 0.0
  %357 = vmatmul.mubr.f32.gmra.mrb[0].mxu0 %v281
  %v358 = vpop.f32.mrb[0].mxu0
  %v359 = vadd.f32 0.0, %v358
  %v360 = vpop.f32.mrb[0].mxu0
  %361 = vmatprep.mubr.f32.mxu0 0.0
  %362 = vmatmul.mubr.f32.gmra.mrb[0].mxu0 %v284
  %v363 = vpop.f32.mrb[0].mxu0
  %v364 = vadd.f32 0.0, %v363
  %v365 = vpop.f32.mrb[0].mxu0
  %366 = vmatprep.mubr.f32.mxu0 0.0
  %367 = vmatmul.mubr.f32.gmra.mrb[0].mxu0 %v287
  %v368 = vpop.f32.mrb[0].mxu0
  %v369 = vadd.f32 0.0, %v368
  %v370 = vpop.f32.mrb[0].mxu0
  %371 = vmatprep.mubr.f32.mxu0 0.0
  %372 = vmatmul.mubr.f32.gmra.mrb[0].mxu0 %v290
  %v373 = vpop.f32.mrb[0].mxu0
  %v374 = vadd.f32 0.0, %v373
  %v375 = vpop.f32.mrb[0].mxu0
  %376 = vdwg.mxu0
  %377 = vmatprep.subr.mxu0 0.0
  %378 = vmatpush1.msra.mxu0 %v251
  %379 = vmatprep.subr.mxu0 0.0
  %380 = vmatpush1.msra.mxu0 %v252
  %381 = vmatprep.subr.mxu0 0.0
  %382 = vmatpush1.msra.mxu0 %v253
  %383 = vmatprep.subr.mxu0 0.0
  %384 = vmatpush1.msra.mxu0 %v254
  %385 = vmatprep.subr.mxu0 0.0
  %386 = vmatpush1.msra.mxu0 %v273
  %387 = vmatprep.subr.mxu0 0.0
  %388 = vmatpush1.msra.mxu0 %v274
  %389 = vmatprep.subr.mxu0 0.0
  %390 = vmatpush1.msra.mxu0 0.0
  %391 = vmatprep.subr.mxu0 0.0
  %392 = vmatpush1.msra.mxu0 0.0
  %393 = vmatprep.subr.mxu0 0.0
  %394 = vmatpush1.msra.mxu0 0.0
  %395 = vmatprep.subr.mxu0 0.0
  %396 = vmatpush1.msra.mxu0 0.0
  %397 = vmatprep.subr.mxu0 0.0
  %398 = vmatpush1.msra.mxu0 0.0
  %399 = vmatprep.subr.mxu0 0.0
  %400 = vmatpush1.msra.mxu0 0.0
  %401 = vmatprep.subr.mxu0 0.0
  %402 = vmatpush1.msra.mxu0 0.0
  %403 = vmatprep.subr.mxu0 0.0
  %404 = vmatpush1.msra.mxu0 0.0
  %405 = vmatprep.subr.mxu0 0.0
  %406 = vmatpush1.msra.mxu0 0.0
  %407 = vmatprep.subr.mxu0 0.0
  %408 = vmatpush1.msra.mxu0 0.0
  %409 = vmatprep.subr.mxu0 0.0
  %410 = vmatpush1.msra.mxu0 0.0
  %411 = vmatprep.subr.mxu0 0.0
  %412 = vmatpush1.msra.mxu0 0.0
  %413 = vmatprep.subr.mxu0 0.0
  %414 = vmatpush1.msra.mxu0 0.0
  %415 = vmatprep.subr.mxu0 0.0
  %416 = vmatpush1.msra.mxu0 0.0
  %417 = vmatprep.subr.mxu0 0.0
  %418 = vmatpush1.msra.mxu0 0.0
  %419 = vmatprep.subr.mxu0 0.0
  %420 = vmatpush1.msra.mxu0 0.0
  %421 = vmatprep.subr.mxu0 0.0
  %422 = vmatpush1.msra.mxu0 0.0
  %423 = vmatprep.subr.mxu0 0.0
  %424 = vmatpush1.msra.mxu0 0.0
  %425 = vmatprep.subr.mxu0 0.0
  %426 = vmatpush1.msra.mxu0 0.0
  %427 = vmatprep.subr.mxu0 0.0
  %428 = vmatpush1.msra.mxu0 0.0
  %429 = vmatprep.subr.mxu0 0.0
  %430 = vmatpush1.msra.mxu0 0.0
  %431 = vmatprep.subr.mxu0 0.0
  %432 = vmatpush1.msra.mxu0 0.0
  %433 = vmatprep.subr.mxu0 0.0
  %434 = vmatpush1.msra.mxu0 0.0
  %435 = vmatprep.subr.mxu0 0.0
  %436 = vmatpush1.msra.mxu0 0.0
  %437 = vmatprep.subr.mxu0 0.0
  %438 = vmatpush1.msra.mxu0 0.0
  %439 = vmatprep.subr.mxu0 0.0
  %440 = vmatpush1.msra.mxu0 0.0
  %441 = vmatprep.mubr.f32.mxu0 0.0
  %442 = vmatmul.mubr.f32.gmra.mrb[0].mxu0 %v281
  %v443 = vpop.f32.mrb[0].mxu0
  %v444 = vadd.f32 0.0, %v443
  %v445 = vpop.f32.mrb[0].mxu0
  %446 = vmatprep.mubr.f32.mxu0 0.0
  %447 = vmatmul.mubr.f32.gmra.mrb[0].mxu0 %v284
  %v448 = vpop.f32.mrb[0].mxu0
  %v449 = vadd.f32 0.0, %v448
  %v450 = vpop.f32.mrb[0].mxu0
  %451 = vmatprep.mubr.f32.mxu0 0.0
  %452 = vmatmul.mubr.f32.gmra.mrb[0].mxu0 %v287
  %v453 = vpop.f32.mrb[0].mxu0
  %v454 = vadd.f32 0.0, %v453
  %v455 = vpop.f32.mrb[0].mxu0
  %456 = vmatprep.mubr.f32.mxu0 0.0
  %457 = vmatmul.mubr.f32.gmra.mrb[0].mxu0 %v290
  %v458 = vpop.f32.mrb[0].mxu0
  %v459 = vadd.f32 0.0, %v458
  %v460 = vpop.f32.mrb[0].mxu0
  %461 = vdwg.mxu0
  %v462 = vmax.f32 %v359, %v444
  %v463 = vmax.f32 %v364, %v449
  %v464 = vmax.f32 %v369, %v454
  %v465 = vmax.f32 %v374, %v459
  %v466 = vld [vmem:[%s4] sm:$0xff]
  %v467 = vld [vmem:[%s4 + $0x8] sm:$0xff]
  %v468 = vld [vmem:[%s4 + $0x10] sm:$0xff]
  %v469 = vld [vmem:[%s4 + $0x18] sm:$0xff]
  %471 = vset.pattern.permute.xlu0 0
  %472 = vperm.xlu0 %471, %v466
  %v473 = vpop.permute.xlu0 %472
  %476 = vset.pattern.permute.xlu0 0
  %477 = vperm.xlu0 %476, %v467
  %v478 = vpop.permute.xlu0 %477
  %481 = vset.pattern.permute.xlu0 0
  %482 = vperm.xlu0 %481, %v468
  %v483 = vpop.permute.xlu0 %482
  %486 = vset.pattern.permute.xlu0 0
  %487 = vperm.xlu0 %486, %v469
  %v488 = vpop.permute.xlu0 %487
  %v490 = vadd.f32 %v462, %v473
  %v491 = vadd.f32 %v463, %v478
  %v492 = vadd.f32 %v464, %v483
  %v493 = vadd.f32 %v465, %v488
  %v494 = vmax.f32 %v490, 0.0
  %v495 = vmax.f32 %v491, 0.0
  %v496 = vmax.f32 %v492, 0.0
  %v497 = vmax.f32 %v493, 0.0
  %502 = vrot.lane.b32.xlu0 %v494, 126
  %v503 = vpop.permute.xlu0 %502
  %504 = vrot.lane.b32.xlu0 %v495, 126
  %v505 = vpop.permute.xlu0 %504
  %506 = vrot.lane.b32.xlu0 %v496, 126
  %v507 = vpop.permute.xlu0 %506
  %508 = vrot.lane.b32.xlu0 %v497, 126
  %v509 = vpop.permute.xlu0 %508
  %514 = vrot.lane.b32.xlu0 %v494, 124
  %v515 = vpop.permute.xlu0 %514
  %516 = vrot.lane.b32.xlu0 %v495, 124
  %v517 = vpop.permute.xlu0 %516
  %518 = vrot.lane.b32.xlu0 %v496, 124
  %v519 = vpop.permute.xlu0 %518
  %520 = vrot.lane.b32.xlu0 %v497, 124
  %v521 = vpop.permute.xlu0 %520
  %526 = vrot.lane.b32.xlu0 %v494, 122
  %v527 = vpop.permute.xlu0 %526
  %528 = vrot.lane.b32.xlu0 %v495, 122
  %v529 = vpop.permute.xlu0 %528
  %530 = vrot.lane.b32.xlu0 %v496, 122
  %v531 = vpop.permute.xlu0 %530
  %532 = vrot.lane.b32.xlu0 %v497, 122
  %v533 = vpop.permute.xlu0 %532
  %v538 = vld [vmem:[%s5] sm:$0xff]
  %v539 = vld [vmem:[%s5 + $0x8] sm:$0xff]
  %v540 = vld [vmem:[%s5 + $0x10] sm:$0xff]
  %v541 = vld [vmem:[%s5 + $0x18] sm:$0xff]
  %v542 = vld [vmem:[%s5 + $0x20] sm:$0xff]
  %v543 = vld [vmem:[%s5 + $0x28] sm:$0xff]
  %v544 = vld [vmem:[%s5 + $0x30] sm:$0xff]
  %v545 = vld [vmem:[%s5 + $0x38] sm:$0xff]
  %v546 = vld [vmem:[%s6] sm:$0xff]
  %v547 = vld [vmem:[%s6 + $0x8] sm:$0xff]
  %v548 = vld [vmem:[%s6 + $0x10] sm:$0xff]
  %v549 = vld [vmem:[%s6 + $0x18] sm:$0xff]
  %v550 = vld [vmem:[%s6 + $0x20] sm:$0xff]
  %v551 = vld [vmem:[%s6 + $0x28] sm:$0xff]
  %v552 = vld [vmem:[%s6 + $0x30] sm:$0xff]
  %v553 = vld [vmem:[%s6 + $0x38] sm:$0xff]
  %555 = vset.pattern.permute.xlu0 0
  %556 = vperm.xlu0 %555, %v546
  %v557 = vpop.permute.xlu0 %556
  %560 = vset.pattern.permute.xlu0 0
  %561 = vperm.xlu0 %560, %v547
  %v562 = vpop.permute.xlu0 %561
  %565 = vset.pattern.permute.xlu0 0
  %566 = vperm.xlu0 %565, %v548
  %v567 = vpop.permute.xlu0 %566
  %570 = vset.pattern.permute.xlu0 0
  %571 = vperm.xlu0 %570, %v549
  %v572 = vpop.permute.xlu0 %571
  %575 = vset.pattern.permute.xlu0 0
  %576 = vperm.xlu0 %575, %v550
  %v577 = vpop.permute.xlu0 %576
  %580 = vset.pattern.permute.xlu0 0
  %581 = vperm.xlu0 %580, %v551
  %v582 = vpop.permute.xlu0 %581
  %585 = vset.pattern.permute.xlu0 0
  %586 = vperm.xlu0 %585, %v552
  %v587 = vpop.permute.xlu0 %586
  %590 = vset.pattern.permute.xlu0 0
  %591 = vperm.xlu0 %590, %v553
  %v592 = vpop.permute.xlu0 %591
  %594 = vmatprep.subr.mxu0 0.0
  %595 = vmatpush1.msra.mxu0 %v494
  %596 = vmatprep.subr.mxu0 0.0
  %597 = vmatpush1.msra.mxu0 %v495
  %598 = vmatprep.subr.mxu0 0.0
  %599 = vmatpush1.msra.mxu0 %v496
  %600 = vmatprep.subr.mxu0 0.0
  %601 = vmatpush1.msra.mxu0 %v497
  %602 = vmatprep.subr.mxu0 0.0
  %603 = vmatpush1.msra.mxu0 %v503
  %604 = vmatprep.subr.mxu0 0.0
  %605 = vmatpush1.msra.mxu0 %v505
  %606 = vmatprep.subr.mxu0 0.0
  %607 = vmatpush1.msra.mxu0 %v507
  %608 = vmatprep.subr.mxu0 0.0
  %609 = vmatpush1.msra.mxu0 %v509
  %610 = vmatprep.subr.mxu0 0.0
  %611 = vmatpush1.msra.mxu0 %v515
  %612 = vmatprep.subr.mxu0 0.0
  %613 = vmatpush1.msra.mxu0 %v517
  %614 = vmatprep.subr.mxu0 0.0
  %615 = vmatpush1.msra.mxu0 %v519
  %616 = vmatprep.subr.mxu0 0.0
  %617 = vmatpush1.msra.mxu0 %v521
  %618 = vmatprep.subr.mxu0 0.0
  %619 = vmatpush1.msra.mxu0 %v527
  %620 = vmatprep.subr.mxu0 0.0
  %621 = vmatpush1.msra.mxu0 %v529
  %622 = vmatprep.subr.mxu0 0.0
  %623 = vmatpush1.msra.mxu0 %v531
  %624 = vmatprep.subr.mxu0 0.0
  %625 = vmatpush1.msra.mxu0 %v533
  %626 = vmatprep.subr.mxu0 0.0
  %627 = vmatpush1.msra.mxu0 0.0
  %628 = vmatprep.subr.mxu0 0.0
  %629 = vmatpush1.msra.mxu0 0.0
  %630 = vmatprep.subr.mxu0 0.0
  %631 = vmatpush1.msra.mxu0 0.0
  %632 = vmatprep.subr.mxu0 0.0
  %633 = vmatpush1.msra.mxu0 0.0
  %634 = vmatprep.subr.mxu0 0.0
  %635 = vmatpush1.msra.mxu0 0.0
  %636 = vmatprep.subr.mxu0 0.0
  %637 = vmatpush1.msra.mxu0 0.0
  %638 = vmatprep.subr.mxu0 0.0
  %639 = vmatpush1.msra.mxu0 0.0
  %640 = vmatprep.subr.mxu0 0.0
  %641 = vmatpush1.msra.mxu0 0.0
  %642 = vmatprep.subr.mxu0 0.0
  %643 = vmatpush1.msra.mxu0 0.0
  %644 = vmatprep.subr.mxu0 0.0
  %645 = vmatpush1.msra.mxu0 0.0
  %646 = vmatprep.subr.mxu0 0.0
  %647 = vmatpush1.msra.mxu0 0.0
  %648 = vmatprep.subr.mxu0 0.0
  %649 = vmatpush1.msra.mxu0 0.0
  %650 = vmatprep.subr.mxu0 0.0
  %651 = vmatpush1.msra.mxu0 0.0
  %652 = vmatprep.subr.mxu0 0.0
  %653 = vmatpush1.msra.mxu0 0.0
  %654 = vmatprep.subr.mxu0 0.0
  %655 = vmatpush1.msra.mxu0 0.0
  %656 = vmatprep.subr.mxu0 0.0
  %657 = vmatpush1.msra.mxu0 0.0
  %658 = vmatprep.mubr.f32.mxu0 0.0
  %659 = vmatmul.mubr.f32.gmra.mrb[0].mxu0 %v538
  %v660 = vpop.f32.mrb[0].mxu0
  %v661 = vadd.f32 %v557, %v660
  %v662 = vpop.f32.mrb[0].mxu0
  %663 = vmatprep.mubr.f32.mxu0 0.0
  %664 = vmatmul.mubr.f32.gmra.mrb[0].mxu0 %v539
  %v665 = vpop.f32.mrb[0].mxu0
  %v666 = vadd.f32 %v562, %v665
  %v667 = vpop.f32.mrb[0].mxu0
  %668 = vmatprep.mubr.f32.mxu0 0.0
  %669 = vmatmul.mubr.f32.gmra.mrb[0].mxu0 %v540
  %v670 = vpop.f32.mrb[0].mxu0
  %v671 = vadd.f32 %v567, %v670
  %v672 = vpop.f32.mrb[0].mxu0
  %673 = vmatprep.mubr.f32.mxu0 0.0
  %674 = vmatmul.mubr.f32.gmra.mrb[0].mxu0 %v541
  %v675 = vpop.f32.mrb[0].mxu0
  %v676 = vadd.f32 %v572, %v675
  %v677 = vpop.f32.mrb[0].mxu0
  %678 = vmatprep.mubr.f32.mxu0 0.0
  %679 = vmatmul.mubr.f32.gmra.mrb[0].mxu0 %v542
  %v680 = vpop.f32.mrb[0].mxu0
  %v681 = vadd.f32 %v577, %v680
  %v682 = vpop.f32.mrb[0].mxu0
  %683 = vmatprep.mubr.f32.mxu0 0.0
  %684 = vmatmul.mubr.f32.gmra.mrb[0].mxu0 %v543
  %v685 = vpop.f32.mrb[0].mxu0
  %v686 = vadd.f32 %v582, %v685
  %v687 = vpop.f32.mrb[0].mxu0
  %688 = vmatprep.mubr.f32.mxu0 0.0
  %689 = vmatmul.mubr.f32.gmra.mrb[0].mxu0 %v544
  %v690 = vpop.f32.mrb[0].mxu0
  %v691 = vadd.f32 %v587, %v690
  %v692 = vpop.f32.mrb[0].mxu0
  %693 = vmatprep.mubr.f32.mxu0 0.0
  %694 = vmatmul.mubr.f32.gmra.mrb[0].mxu0 %v545
  %v695 = vpop.f32.mrb[0].mxu0
  %v696 = vadd.f32 %v592, %v695
  %v697 = vpop.f32.mrb[0].mxu0
  %698 = vdwg.mxu0
  %v699 = vmax.f32 %v661, 0.0
  %v700 = vmax.f32 %v666, 0.0
  %v701 = vmax.f32 %v671, 0.0
  %v702 = vmax.f32 %v676, 0.0
  %v703 = vmax.f32 %v681, 0.0
  %v704 = vmax.f32 %v686, 0.0
  %v705 = vmax.f32 %v691, 0.0
  %v706 = vmax.f32 %v696, 0.0
  %v707 = vld [vmem:[%s7] sm:$0xf]
  %v708 = vld [vmem:[%s8] sm:$0xf]
  %710 = vset.pattern.permute.xlu0 0
  %711 = vperm.xlu0 %710, %v708
  %v712 = vpop.permute.xlu0 %711
  %vm714 = vcmask 523264
  %v716 = vsel %vm714, %v707, 0
  %718 = vmatprep.subr.mxu0 0.0
  %719 = vmatpush1.msra.mxu0 %v699
  %720 = vmatprep.subr.mxu0 0.0
  %721 = vmatpush1.msra.mxu0 %v700
  %722 = vmatprep.subr.mxu0 0.0
  %723 = vmatpush1.msra.mxu0 %v701
  %724 = vmatprep.subr.mxu0 0.0
  %725 = vmatpush1.msra.mxu0 %v702
  %726 = vmatprep.subr.mxu0 0.0
  %727 = vmatpush1.msra.mxu0 %v703
  %728 = vmatprep.subr.mxu0 0.0
  %729 = vmatpush1.msra.mxu0 %v704
  %730 = vmatprep.subr.mxu0 0.0
  %731 = vmatpush1.msra.mxu0 %v705
  %732 = vmatprep.subr.mxu0 0.0
  %733 = vmatpush1.msra.mxu0 %v706
  %734 = vmatprep.subr.mxu0 0.0
  %735 = vmatpush1.msra.mxu0 0.0
  %736 = vmatprep.subr.mxu0 0.0
  %737 = vmatpush1.msra.mxu0 0.0
  %738 = vmatprep.subr.mxu0 0.0
  %739 = vmatpush1.msra.mxu0 0.0
  %740 = vmatprep.subr.mxu0 0.0
  %741 = vmatpush1.msra.mxu0 0.0
  %742 = vmatprep.subr.mxu0 0.0
  %743 = vmatpush1.msra.mxu0 0.0
  %744 = vmatprep.subr.mxu0 0.0
  %745 = vmatpush1.msra.mxu0 0.0
  %746 = vmatprep.subr.mxu0 0.0
  %747 = vmatpush1.msra.mxu0 0.0
  %748 = vmatprep.subr.mxu0 0.0
  %749 = vmatpush1.msra.mxu0 0.0
  %750 = vmatprep.subr.mxu0 0.0
  %751 = vmatpush1.msra.mxu0 0.0
  %752 = vmatprep.subr.mxu0 0.0
  %753 = vmatpush1.msra.mxu0 0.0
  %754 = vmatprep.subr.mxu0 0.0
  %755 = vmatpush1.msra.mxu0 0.0
  %756 = vmatprep.subr.mxu0 0.0
  %757 = vmatpush1.msra.mxu0 0.0
  %758 = vmatprep.subr.mxu0 0.0
  %759 = vmatpush1.msra.mxu0 0.0
  %760 = vmatprep.subr.mxu0 0.0
  %761 = vmatpush1.msra.mxu0 0.0
  %762 = vmatprep.subr.mxu0 0.0
  %763 = vmatpush1.msra.mxu0 0.0
  %764 = vmatprep.subr.mxu0 0.0
  %765 = vmatpush1.msra.mxu0 0.0
  %766 = vmatprep.subr.mxu0 0.0
  %767 = vmatpush1.msra.mxu0 0.0
  %768 = vmatprep.subr.mxu0 0.0
  %769 = vmatpush1.msra.mxu0 0.0
  %770 = vmatprep.subr.mxu0 0.0
  %771 = vmatpush1.msra.mxu0 0.0
  %772 = vmatprep.subr.mxu0 0.0
  %773 = vmatpush1.msra.mxu0 0.0
  %774 = vmatprep.subr.mxu0 0.0
  %775 = vmatpush1.msra.mxu0 0.0
  %776 = vmatprep.subr.mxu0 0.0
  %777 = vmatpush1.msra.mxu0 0.0
  %778 = vmatprep.subr.mxu0 0.0
  %779 = vmatpush1.msra.mxu0 0.0
  %780 = vmatprep.subr.mxu0 0.0
  %781 = vmatpush1.msra.mxu0 0.0
  %782 = vmatprep.mubr.f32.mxu0 0.0
  %783 = vmatmul.mubr.f32.gmra.mrb[0].mxu0 %v716
  %v784 = vpop.f32.mrb[0].mxu0
  %v785 = vadd.f32 %v712, %v784
  %v786 = vpop.f32.mrb[0].mxu0
  %787 = vdwg.mxu0
  %vm788 = vcmask 11264
  %789 = vst.msk [vmem:[%s9] sm:$0xf] %vm788, %v785
  // Predicated region
  $region38: #{cnn_forward.1} parent=0 // pred_check
    _
  $region39: #{cnn_forward.1} parent=0 // pred_check_branch
    %791 = sbr.rel (0) target = $region41
  $region40: #{cnn_forward.1} parent=0 // pred_region
    _
  $region41: #{cnn_forward.1} parent=0 // pred_fallthru
    _
  // Predicated region
  $region42: #{cnn_forward.1} parent=0 // pred_check
    _
  $region43: #{cnn_forward.1} parent=0 // pred_check_branch
    %793 = sbr.rel (0) target = $region45
  $region44: #{cnn_forward.1} parent=0 // pred_region
    _
  $region45: #{cnn_forward.1} parent=0 // pred_fallthru
    _

</llo_original>
